<compile_context>
chip_gen: v7x
topology: tpu7x:2x2x1
jax: 0.10.0
libtpu: 0.0.40
codegen_flags: <defaults>
</compile_context>

<pallas_src>
import jax
import jax.numpy as jnp
from jax.experimental import pallas as pl
from jax.experimental.pallas import tpu as pltpu

_ONEHOT_MAX_V = 2048        # above this the one-hot matmul does far more work than the gather
                            # (could be lowered further on v5e where VPU/vst slots bind first)
_MAX_ONEHOT_CHUNK = 1024    # rows gathered per grid step on the one-hot path
_ROWCOPY_CHUNK_CAP = 256    # rows per grid step on the DMA-gather paths
_DMA_INFLIGHT = 8           # rotating DMA semaphore pool depth (row copies in flight)


def _round_up(x, m):
    return ((x + m - 1) // m) * m


def _vmem_capacity_bytes():
    try:
        return int(pltpu.get_tpu_info().vmem_capacity_bytes)
    except Exception:
        return 64 << 20     # conservative default (v7x-sized VMEM)


def _pick_chunk(n, cap):
    """Rows per grid step. Prefers (a) a chunk that divides n (no padding and no
    post-kernel tail slice), (b) >= 2 grid steps so v7x's two TensorCores both
    get work, (c) as large as `cap` allows."""
    cap = max(8, (cap // 8) * 8)
    if n <= 8:
        return n, n                                    # single full-array block
    upper = min(cap, max(8, ((n // 2) // 8) * 8))      # <= n/2  ->  >= 2 steps
    for c in range(upper, 7, -8):
        if n % c == 0:
            return c, n
    if n % 8 == 0 and n <= cap:
        return n, n                                    # single step, still no pad
    c = min(cap, _round_up(n, 8))
    return c, _round_up(n, c)


# ----------------------------------------------------------------------------
# Fast path (small V): table VMEM-resident; gather = one-hot matmul on the MXU.
# ----------------------------------------------------------------------------
def _onehot_gather_kernel(ids_ref, emb_ref, out_ref):
    """ids_ref: VMEM int32 [chunk, 1]; emb_ref: VMEM [V, H]; out_ref: [chunk, H]."""
    chunk = out_ref.shape[0]
    v = emb_ref.shape[0]
    ids = ids_ref[...]                                            # (chunk, 1)
    cols = jax.lax.broadcasted_iota(jnp.int32, (chunk, v), 1)     # (chunk, V)
    onehot = (cols == ids).astype(emb_ref.dtype)                  # built in the table dtype
    # HIGHEST only when the table is genuinely f32 (exact gather); bf16 tables
    # use the single-pass bf16 MXU path (0/1 one-hot is exact in bf16 too).
    precision = (jax.lax.Precision.HIGHEST if emb_ref.dtype == jnp.float32
                 else jax.lax.Precision.DEFAULT)
    out_ref[...] = jnp.dot(onehot, emb_ref[...],
                           preferred_element_type=jnp.float32,
                           precision=precision).astype(out_ref.dtype)


# ----------------------------------------------------------------------------
# Row-copy gather (mid/large V): pipelined per-row DMAs over a rotating
# semaphore pool. Used both with a VMEM-resident table (global_out=False,
# rows land in the pipelined output block) and with an HBM table + HBM output
# (global_out=True, direct HBM->HBM copies, no VMEM staging).
# ----------------------------------------------------------------------------
def _make_row_gather_kernel(chunk, global_out):
    def kernel(ids_ref, table_ref, out_ref, sems):
        base = pl.program_id(0) * chunk

        def copy_desc(i):
            row = ids_ref[base + i]                    # SMEM scalar (prefetched ids)
            dst = (base + i) if global_out else i
            return pltpu.make_async_copy(table_ref.at[row], out_ref.at[dst],
                                         sems.at[i % _DMA_INFLIGHT])

        depth = min(_DMA_INFLIGHT, chunk)

        def prime(i, c):                               # fill the pipeline
            copy_desc(i).start()
            return c
        jax.lax.fori_loop(0, depth, prime, 0, unroll=True)

        def steady(i, c):                              # wait one, issue one
            copy_desc(i).wait()
            copy_desc(i + depth).start()
            return c
        jax.lax.fori_loop(0, chunk - depth, steady, 0)

        def drain(i, c):                               # drain remaining copies
            copy_desc(i).wait()
            return c
        jax.lax.fori_loop(chunk - depth, chunk, drain, 0)

    return kernel


def embedding_gather(emb, flat_ids):
    """emb: [V, H], flat_ids: [N] int  ->  [N, H] == emb[flat_ids]."""
    n = int(flat_ids.shape[0])
    v, h = emb.shape
    itemsize = emb.dtype.itemsize
    table_bytes = v * h * itemsize
    ids = flat_ids.astype(jnp.int32)

    vmem_cap = _vmem_capacity_bytes()
    vmem_clamp = (vmem_cap * 3) // 4                   # v7x: 48 MiB, v5e/v6e: 96 MiB
    # Pallas double-buffers the (V, H) table block even with a constant
    # index_map, so residency is budgeted with 2x the table plus headroom.
    resident = (2 * table_bytes + (12 << 20)) <= vmem_clamp

    if v <= _ONEHOT_MAX_V and resident:
        # ---- small vocab: VMEM-resident table, gather as one-hot MXU matmul ----
        onehot_budget = min(16 << 20, vmem_cap // 8)   # 8 MiB on v7x, 16 MiB on v5e/v6e
        cap = min(_MAX_ONEHOT_CHUNK,
                  max(8, (onehot_budget // (v * itemsize)) // 8 * 8))
        chunk, n_pad = _pick_chunk(n, cap)
        if n_pad != n:
            ids = jnp.pad(ids, (0, n_pad - n))         # pad rows read row 0; sliced off below

        vmem_limit = int(2 * table_bytes               # double-buffered table block
                         + chunk * v * itemsize        # one-hot operand
                         + 2 * chunk * h * itemsize    # double-buffered output block
                         + 2 * chunk * 4               # ids blocks
                         + (4 << 20))                  # internal scratch headroom
        vmem_limit = max(16 << 20, min(vmem_limit, vmem_clamp))

        out = pl.pallas_call(
            _onehot_gather_kernel,
            out_shape=jax.ShapeDtypeStruct((n_pad, h), emb.dtype),
            grid_spec=pl.GridSpec(
                grid=(n_pad // chunk,),
                in_specs=[
                    pl.BlockSpec((chunk, 1), lambda c: (c, 0)),   # ids column for this chunk
                    pl.BlockSpec((v, h), lambda c: (0, 0)),       # whole table, fetched once
                ],
                out_specs=pl.BlockSpec((chunk, h), lambda c: (c, 0)),
            ),
            compiler_params=pltpu.CompilerParams(
                dimension_semantics=("parallel",),     # independent chunks -> both v7x TCs
                vmem_limit_bytes=vmem_limit),
        )(ids.reshape(n_pad, 1), emb)

    elif resident:
        # ---- mid-size vocab: VMEM-resident table, per-row dynamic-slice copies ----
        chunk, n_pad = _pick_chunk(n, _ROWCOPY_CHUNK_CAP)
        if n_pad != n:
            ids = jnp.pad(ids, (0, n_pad - n))
        vmem_limit = int(2 * table_bytes + 2 * chunk * h * itemsize + (4 << 20))
        vmem_limit = max(16 << 20, min(vmem_limit, vmem_clamp))
        out = pl.pallas_call(
            _make_row_gather_kernel(chunk, global_out=False),
            out_shape=jax.ShapeDtypeStruct((n_pad, h), emb.dtype),
            grid_spec=pltpu.PrefetchScalarGridSpec(
                num_scalar_prefetch=1,
                grid=(n_pad // chunk,),
                in_specs=[pl.BlockSpec((v, h), lambda c, ids_ref: (0, 0))],
                out_specs=pl.BlockSpec((chunk, h), lambda c, ids_ref: (c, 0)),
                scratch_shapes=[pltpu.SemaphoreType.DMA((_DMA_INFLIGHT,))],
            ),
            compiler_params=pltpu.CompilerParams(
                dimension_semantics=("parallel",),
                vmem_limit_bytes=vmem_limit),
        )(ids, emb)

    else:
        # ---- table too large for VMEM: pipelined HBM -> HBM row copies ----
        chunk, n_pad = _pick_chunk(n, _ROWCOPY_CHUNK_CAP)
        if n_pad != n:
            ids = jnp.pad(ids, (0, n_pad - n))
        out = pl.pallas_call(
            _make_row_gather_kernel(chunk, global_out=True),
            out_shape=jax.ShapeDtypeStruct((n_pad, h), emb.dtype),
            grid_spec=pltpu.PrefetchScalarGridSpec(
                num_scalar_prefetch=1,
                grid=(n_pad // chunk,),
                in_specs=[pl.BlockSpec(memory_space=pl.ANY)],     # table stays in HBM
                out_specs=pl.BlockSpec(memory_space=pl.ANY),      # rows written by DMA
                scratch_shapes=[pltpu.SemaphoreType.DMA((_DMA_INFLIGHT,))],
            ),
            compiler_params=pltpu.CompilerParams(
                dimension_semantics=("parallel",)),
        )(ids, emb)

    return out if n_pad == n else out[:n]


# ----------------------------------------------------------------------------
# Module init / forward
# ----------------------------------------------------------------------------
def xavier_normal(key, rows, cols, dtype=jnp.float32):
    # torch.nn.init.xavier_normal_ for a 2-D tensor: std = sqrt(2 / (fan_in + fan_out)).
    std = (2.0 / (rows + cols)) ** 0.5
    return (std * jax.random.normal(key, (rows, cols))).astype(dtype)


def init_concat_embeddings_4(key, *, code_vocab_size, code_hidden_size,
                             n_dx, n_px, n_item, n_rx):
    n_special = code_vocab_size - n_dx - n_px - n_item - n_rx
    ks = jax.random.split(key, 5)
    params = {
        "special": xavier_normal(ks[0], n_special, code_hidden_size),
        "dx":      xavier_normal(ks[1], n_dx, code_hidden_size),
        "px":      xavier_normal(ks[2], n_px, code_hidden_size),
        "item":    xavier_normal(ks[3], n_item, code_hidden_size),
        "rx":      xavier_normal(ks[4], n_rx, code_hidden_size),
    }
    # Hoisted out of the per-call forward path: the PyTorch module re-concats
    # the full [V, H] table on every forward, which doubles HBM traffic.
    params["table"] = jnp.concatenate(
        [params["special"], params["dx"], params["px"],
         params["item"], params["rx"]], axis=0)
    return params


def concat_embeddings_4_forward(params, input_ids):
    emb = params["table"]                                 # [code_vocab_size, H]
    flat = input_ids.reshape(-1)
    gathered = embedding_gather(emb, flat)                # [B*L, H] (Pallas kernel)
    return gathered.reshape(input_ids.shape + (emb.shape[1],))


if __name__ == "__main__":
    key = jax.random.PRNGKey(0)
    k_params, k_ids, k_ids2, k_tab3, k_ids3 = jax.random.split(key, 5)

    # --- Test 1: module-shaped config (small vocab -> one-hot fast path, 2 grid steps) ---
    code_hidden_size = 128
    n_dx, n_px, n_item, n_rx = 10, 8, 6, 12
    code_vocab_size = 40          # -> 4 "special" rows
    params = init_concat_embeddings_4(
        k_params,
        code_vocab_size=code_vocab_size, code_hidden_size=code_hidden_size,
        n_dx=n_dx, n_px=n_px, n_item=n_item, n_rx=n_rx)
    B, L = 2, 8
    input_ids = jax.random.randint(k_ids, (B, L), 0, code_vocab_size, dtype=jnp.int32)
    out = jax.block_until_ready(concat_embeddings_4_forward(params, input_ids))
    ref = params["table"][input_ids]
    assert out.shape == (B, L, code_hidden_size)
    assert jnp.allclose(out, ref, atol=1e-6, rtol=1e-6), \
        float(jnp.max(jnp.abs(out - ref)))

    # --- Test 2: ragged token count (exercises padding + tail handling) ---
    input_ids2 = jax.random.randint(k_ids2, (3, 7), 0, code_vocab_size, dtype=jnp.int32)
    out2 = jax.block_until_ready(concat_embeddings_4_forward(params, input_ids2))
    ref2 = params["table"][input_ids2]
    assert out2.shape == (3, 7, code_hidden_size)
    assert jnp.allclose(out2, ref2, atol=1e-6, rtol=1e-6)

    # --- Test 3: bf16 table (exercises the native single-pass MXU precision branch) ---
    tab3 = (jax.random.normal(k_tab3, (64, 256)) * 0.02).astype(jnp.bfloat16)
    ids3 = jax.random.randint(k_ids3, (128,), 0, 64, dtype=jnp.int32)
    out3 = jax.block_until_ready(embedding_gather(tab3, ids3))
    ref3 = tab3[ids3]
    assert jnp.array_equal(out3.astype(jnp.float32), ref3.astype(jnp.float32))

    print("KERNEL_OK")
</pallas_src>

<mosaic_0001>
module attributes {stable_mosaic.version = 11 : i64} {
  func.func @_onehot_gather_kernel(%arg0: i32, %arg1: memref<8x1xi32, #tpu.memory_space<vmem>>, %arg2: memref<40x128xf32, #tpu.memory_space<vmem>>, %arg3: memref<8x128xf32, #tpu.memory_space<vmem>>) attributes {dimension_semantics = [#tpu.dimension_semantics<parallel>], iteration_bounds = array<i64: 2>, scalar_prefetch = 0 : i64, scratch_operands = 0 : i64, tpu.core_type = #tpu.core_type<tc>, window_params = [{transform_indices = @transform_0, window_bounds = array<i64: 8, 1>}, {pipeline_mode = #tpu.pipeline_mode<synchronous>, transform_indices = @transform_1, window_bounds = array<i64: 40, 128>}, {transform_indices = @transform_2, window_bounds = array<i64: 8, 128>}]} {
    %c0 = arith.constant 0 : index
    %c0_0 = arith.constant 0 : index
    %0 = vector.load %arg1[%c0, %c0_0] : memref<8x1xi32, #tpu.memory_space<vmem>>, vector<8x1xi32>
    %1 = tpu.iota {dimensions = array<i32: 1>} : vector<8x40xi32>
    %2 = vector.broadcast %0 : vector<8x1xi32> to vector<8x40xi32>
    %3 = arith.cmpi eq, %1, %2 : vector<8x40xi32>
    %4 = arith.extui %3 : vector<8x40xi1> to vector<8x40xi32>
    %5 = arith.sitofp %4 : vector<8x40xi32> to vector<8x40xf32>
    %c0_1 = arith.constant 0 : index
    %c0_2 = arith.constant 0 : index
    %6 = vector.load %arg2[%c0_1, %c0_2] : memref<40x128xf32, #tpu.memory_space<vmem>>, vector<40x128xf32>
    %cst = arith.constant dense<0.000000e+00> : vector<8x128xf32>
    %7 = tpu.matmul %5, %6, %cst {dimension_numbers = #tpu.dot_dimension_numbers<[1], [0], [0], [1], [0, 0, 1, 1], [], []>, precision = #tpu.contract_precision<fp32>} : vector<8x40xf32>, vector<40x128xf32>, vector<8x128xf32> -> vector<8x128xf32>
    %c0_3 = arith.constant 0 : index
    %c0_4 = arith.constant 0 : index
    %8 = vector.load %arg3[%c0_3, %c0_4] : memref<8x128xf32, #tpu.memory_space<vmem>>, vector<8x128xf32>
    tpu.vector_store %arg3[%c0_3, %c0_4], %7 {strides = array<i32>} : memref<8x128xf32, #tpu.memory_space<vmem>>, vector<8x128xf32>,
    return
  }
  func.func @transform_0(%arg0: i32) -> (i32, i32) {
    %c0_i32 = arith.constant 0 : i32
    %c0_i32_0 = arith.constant 0 : i32
    return %arg0, %c0_i32 : i32, i32
  }
  func.func @transform_1(%arg0: i32) -> (i32, i32) {
    %c0_i32 = arith.constant 0 : i32
    %c0_i32_0 = arith.constant 0 : i32
    %c0_i32_1 = arith.constant 0 : i32
    return %c0_i32, %c0_i32_0 : i32, i32
  }
  func.func @transform_2(%arg0: i32) -> (i32, i32) {
    %c0_i32 = arith.constant 0 : i32
    %c0_i32_0 = arith.constant 0 : i32
    return %arg0, %c0_i32 : i32, i32
  }
}

</mosaic_0001>

<llo_original>
// kernel: tpu_custom_call.1
$region0: #{tpu_custom_call.1}
  #allocation0 [shape = 'u32[]', space=smem, size = 0x4, offset = 0x4, fixed_abs, tag = 'smem constant byte address 0x4 - core index']
  #allocation1 [shape = 'u32[144,128]{1,0:T(1,128)}', space=vmem, size = 0x12000, scoped, tag = 'internal scratch']
  %s0 = inlined_call_operand.vmem [shape: s32[16,1], index: 0, kind: input, shape index: {}]
  %s1 = inlined_call_operand.hbm [shape: f32[40,128], index: 1, kind: input, shape index: {}]
  %s2 = inlined_call_operand.hbm [shape: f32[16,128], index: 2, kind: output, shape index: {}]
  %s3 = sld [smem:[#allocation0]]
  $region45: #{tpu_custom_call.1} parent=0
    _
  %s5 = ssub.s32 1, %s3
  %s6 = scalar_select 0, %s5, %s3
  $region1: #{tpu_custom_call.1} parent=0
    #allocation2 [shape = 'u8[20480]{0}', space=vmem, size = 0x5000, scoped, tag = 'input window, operand 1, single buffered']
    #allocation3 [shape = 's32[2]{0}', space=sflag, size = 0x8, scoped, tag = 'scoped memory for tpu_custom_call.1']
    #allocation4 [shape = 's32[2]{0}', space=sflag, size = 0x8, scoped, tag = 'scoped memory for tpu_custom_call.1']
    #allocation5 [shape = 'u8[8192]{0}', space=vmem, size = 0x2000, scoped, tag = 'output window, operand 0']
    %7 = vsyncpa [#allocation3], 0
    %8 = vsyncpa [#allocation4], 0
    %s9 = scalar_lea.sflag [#allocation4], 1
    %10 = vsyncpa %s9, 0
    loop: start=0, step=1, limit=4
    $region2: #{tpu_custom_call.1} parent=1 // loop_pre_header
      _
    $region3: #{tpu_custom_call.1} parent=1 // loop_header
      %s12 = sphi 0, %s16
      %p13 = scmp.ge.s32.totalorder %s12, 4
      %s22 = sphi 0, %s24
      %s25 = sphi 0, %s22
      %s26 = sphi 0, %s25
      %s42 = sphi 0, %s26
      %s46 = sphi 0, %s46
      %s48 = sphi 0, %s46
      %s49 = sphi 0, %s48
      %s63 = sphi 0, %s49
      %s69 = sphi 0, %s71
      %s72 = sphi 0, %s69
      %s73 = sphi 0, %s72
      %s89 = sphi 0, %s73
    $region4: #{tpu_custom_call.1} parent=1 // loop_header_branch
      %15 = sbr.rel (%p13) target = $region8
    $region5: #{tpu_custom_call.1} parent=1 // loop_body
      %s17 = ssub.s32 %s12, 1
      %s18 = ssub.s32 %s12, 2
      %s19 = sadd.s32 %s12, 1
      %s20 = ssub.s32 %s12, %s19
      %p21 = scmp.eq.s32.totalorder %s20, 0
      %s23 = sadd.s32 %s22, 1
      %s24 = scalar_select %p21, %s22, %s23
      %p27 = pneg %p21
      %p28 = scmp.eq.s32.totalorder %s12, 1
      %p29 = por %p27, %p28
      %p30 = scmp.ne.s32.totalorder %s22, %s25
      %p31 = scmp.eq.s32.totalorder %s12, 0
      %p32 = por %p30, %p31
      %p33 = scmp.ne.s32.totalorder %s22, %s25
      %p34 = scmp.eq.s32.totalorder %s17, 1
      %p35 = por %p33, %p34
      %p36 = scmp.ne.s32.totalorder %s25, %s26
      %p37 = scmp.eq.s32.totalorder %s17, 0
      %p38 = por %p36, %p37
      %p39 = scmp.ne.s32.totalorder %s25, %s26
      %p40 = scmp.eq.s32.totalorder %s18, 1
      %p41 = por %p39, %p40
      %p43 = scmp.ne.s32.totalorder %s26, %s42
      %p44 = scmp.eq.s32.totalorder %s18, 0
      %p45 = por %p43, %p44
      %s47 = sadd.s32 %s46, 1
      %p50 = scmp.eq.s32.totalorder %s12, 1
      %p51 = scmp.ne.s32.totalorder %s46, %s48
      %p52 = scmp.eq.s32.totalorder %s12, 0
      %p53 = por %p51, %p52
      %p54 = scmp.ne.s32.totalorder %s46, %s48
      %p55 = scmp.eq.s32.totalorder %s17, 1
      %p56 = por %p54, %p55
      %p57 = scmp.ne.s32.totalorder %s48, %s49
      %p58 = scmp.eq.s32.totalorder %s17, 0
      %p59 = por %p57, %p58
      %p60 = scmp.ne.s32.totalorder %s48, %s49
      %p61 = scmp.eq.s32.totalorder %s18, 1
      %p62 = por %p60, %p61
      %p64 = scmp.ne.s32.totalorder %s49, %s63
      %p65 = scmp.eq.s32.totalorder %s18, 0
      %p66 = por %p64, %p65
      %s67 = ssub.s32 %s12, %s19
      %p68 = scmp.eq.s32.totalorder %s67, 0
      %s70 = sadd.s32 %s69, 1
      %s71 = scalar_select %p68, %s69, %s70
      %p74 = pneg %p68
      %p75 = scmp.eq.s32.totalorder %s12, 1
      %p76 = por %p74, %p75
      %p77 = scmp.ne.s32.totalorder %s69, %s72
      %p78 = scmp.eq.s32.totalorder %s12, 0
      %p79 = por %p77, %p78
      %p80 = scmp.ne.s32.totalorder %s69, %s72
      %p81 = scmp.eq.s32.totalorder %s17, 1
      %p82 = por %p80, %p81
      %p83 = scmp.ne.s32.totalorder %s72, %s73
      %p84 = scmp.eq.s32.totalorder %s17, 0
      %p85 = por %p83, %p84
      %p86 = scmp.ne.s32.totalorder %s72, %s73
      %p87 = scmp.eq.s32.totalorder %s18, 1
      %p88 = por %p86, %p87
      %p90 = scmp.ne.s32.totalorder %s73, %s89
      %p91 = scmp.eq.s32.totalorder %s18, 0
      %p92 = por %p90, %p91
      %p93 = scmp.le.s32.totalorder 1, %s12
      %p94 = scmp.lt.s32.totalorder %s12, 3
      %p95 = pnand %p93, %p94
      %p96 = pneg %p95
      // Predicated region
      $region9: #{tpu_custom_call.1} parent=5 // pred_check
        _
      $region10: #{tpu_custom_call.1} parent=5 // pred_check_branch
        %98 = sbr.rel (%p95) target = $region12
      $region11: #{tpu_custom_call.1} parent=5 // pred_region
        %s99 = ssub.s32 %s12, 1
        // Predicated region
        $region13: #{tpu_custom_call.1} parent=11 // pred_check
          %p100 = pneg %p59
        $region14: #{tpu_custom_call.1} parent=11 // pred_check_branch
          %102 = sbr.rel (%p100) target = $region16
        $region15: #{tpu_custom_call.1} parent=11 // pred_region
          %s104 = ssub.s32 640, 640
          %105 = vsyncadd [#allocation3], %s104
          %s106 = sshll.u32 [#allocation2], 4
          %s107 = int_to_ptr.vmem [resolvable:$true] %s106
          %112 = dma.hbm_to_vmem [thread:$0]  %s1, 640, %s107, [#allocation3], 128, 128, 8
        $region16: #{tpu_custom_call.1} parent=11 // pred_fallthru
          _
      $region12: #{tpu_custom_call.1} parent=5 // pred_fallthru
        _
      %p113 = scmp.lt.s32.totalorder %s12, 2
      // Predicated region
      $region17: #{tpu_custom_call.1} parent=5 // pred_check
        %p114 = pneg %p113
      $region18: #{tpu_custom_call.1} parent=5 // pred_check_branch
        %116 = sbr.rel (%p114) target = $region20
      $region19: #{tpu_custom_call.1} parent=5 // pred_region
        // Predicated region
        $region21: #{tpu_custom_call.1} parent=19 // pred_check
          %p117 = pneg %p32
        $region22: #{tpu_custom_call.1} parent=19 // pred_check_branch
          %119 = sbr.rel (%p117) target = $region24
        $region23: #{tpu_custom_call.1} parent=19 // pred_region
          %p120 = scmp.lt.s32.totalorder %s12, 1
          %s121 = scalar_select %p120, %s12, 1
          %s122 = smul.addr %s121, 8
          %s123 = scalar_lea.vmem %s0, %s122
        $region24: #{tpu_custom_call.1} parent=19 // pred_fallthru
          _
      $region20: #{tpu_custom_call.1} parent=5 // pred_fallthru
        _
      %p124 = scmp.le.s32.totalorder 1, %s12
      %p125 = scmp.lt.s32.totalorder %s12, 3
      %p126 = pnand %p124, %p125
      %p127 = pneg %p126
      // Predicated region
      $region25: #{tpu_custom_call.1} parent=5 // pred_check
        _
      $region26: #{tpu_custom_call.1} parent=5 // pred_check_branch
        %129 = sbr.rel (%p126) target = $region28
      $region27: #{tpu_custom_call.1} parent=5 // pred_region
        %s130 = ssub.s32 %s12, 1
        // Predicated region
        $region29: #{tpu_custom_call.1} parent=27 // pred_check
          %p131 = pneg %p59
        $region30: #{tpu_custom_call.1} parent=27 // pred_check_branch
          %133 = sbr.rel (%p131) target = $region32
        $region31: #{tpu_custom_call.1} parent=27 // pred_region
          %134 = dma.done [#allocation3], 640
        $region32: #{tpu_custom_call.1} parent=27 // pred_fallthru
          _
        %p135 = scmp.lt.s32.totalorder %s17, 1
        %s136 = scalar_select %p135, %s17, 1
        %s137 = smul.addr %s136, 8
        %s138 = scalar_lea.vmem %s0, %s137
        %p139 = pneg %p38
        %p140 = pneg %p35
        %p141 = pneg %p59
        %p142 = pneg %p56
        %p143 = pneg %p85
        %p144 = pneg %p82
        %s145 = sand.u32 %s72, 1
        %s146 = scalar_lea.sflag [#allocation4], %s145
        %s147 = sand.u32 %s72, 1
        %s148 = smul.addr %s147, 8
        %s149 = scalar_lea.vmem [#allocation5], %s148
        %p150 = scmp.lt.s32.totalorder %s17, 1
        %s151 = scalar_select %p150, %s17, 1
        %s152 = smul.addr %s151, 8
        %s153 = scalar_lea.vmem %s0, %s152
        %v154 = vld [vmem:[%s153] sm:$0xff]
        %v155 = vlaneseq
        %v156 = vand.u32 %v155, 127
        %157 = vset.pattern.permute.xlu0 0
        %158 = vperm.xlu0 %157, %v154
        %v159 = vpop.permute.xlu0 %158
        %vm160 = vcmp.eq.s32.totalorder %v156, %v159
        %v161 = vsel %vm160, 1, 0
        %v162 = vcvt.s32.f32 %v161
        %v163 = vld [vmem:[#allocation2] sm:$0xff]
        %v164 = vld [vmem:[#allocation2 + $0x8] sm:$0xff]
        %v165 = vld [vmem:[#allocation2 + $0x10] sm:$0xff]
        %v166 = vld [vmem:[#allocation2 + $0x18] sm:$0xff]
        %v167 = vld [vmem:[#allocation2 + $0x20] sm:$0xff]
        %vm168 = vcmask 326656
        %v170 = vsel %vm168, %v162, 0
        %172 = vmatprep.subr.mxu0 0.0
        %v173 = vand.u32 %v163, 4294901760
        %174 = vmatpush1.msra.mxu0 %v173
        %175 = vmatprep.subr.mxu0 0.0
        %v176 = vand.u32 %v164, 4294901760
        %177 = vmatpush1.msra.mxu0 %v176
        %178 = vmatprep.subr.mxu0 0.0
        %v179 = vand.u32 %v165, 4294901760
        %180 = vmatpush1.msra.mxu0 %v179
        %181 = vmatprep.subr.mxu0 0.0
        %v182 = vand.u32 %v166, 4294901760
        %183 = vmatpush1.msra.mxu0 %v182
        %184 = vmatprep.subr.mxu0 0.0
        %v185 = vand.u32 %v167, 4294901760
        %186 = vmatpush1.msra.mxu0 %v185
        %187 = vmatprep.subr.mxu0 0.0
        %188 = vmatpush1.msra.mxu0 0.0
        %189 = vmatprep.subr.mxu0 0.0
        %190 = vmatpush1.msra.mxu0 0.0
        %191 = vmatprep.subr.mxu0 0.0
        %192 = vmatpush1.msra.mxu0 0.0
        %193 = vmatprep.subr.mxu0 0.0
        %194 = vmatpush1.msra.mxu0 0.0
        %195 = vmatprep.subr.mxu0 0.0
        %196 = vmatpush1.msra.mxu0 0.0
        %197 = vmatprep.subr.mxu0 0.0
        %198 = vmatpush1.msra.mxu0 0.0
        %199 = vmatprep.subr.mxu0 0.0
        %200 = vmatpush1.msra.mxu0 0.0
        %201 = vmatprep.subr.mxu0 0.0
        %202 = vmatpush1.msra.mxu0 0.0
        %203 = vmatprep.subr.mxu0 0.0
        %204 = vmatpush1.msra.mxu0 0.0
        %205 = vmatprep.subr.mxu0 0.0
        %206 = vmatpush1.msra.mxu0 0.0
        %207 = vmatprep.subr.mxu0 0.0
        %208 = vmatpush1.msra.mxu0 0.0
        %209 = vmatprep.subr.mxu0 0.0
        %210 = vmatpush1.msra.mxu0 0.0
        %211 = vmatprep.subr.mxu0 0.0
        %212 = vmatpush1.msra.mxu0 0.0
        %213 = vmatprep.subr.mxu0 0.0
        %214 = vmatpush1.msra.mxu0 0.0
        %215 = vmatprep.subr.mxu0 0.0
        %216 = vmatpush1.msra.mxu0 0.0
        %217 = vmatprep.subr.mxu0 0.0
        %218 = vmatpush1.msra.mxu0 0.0
        %219 = vmatprep.subr.mxu0 0.0
        %220 = vmatpush1.msra.mxu0 0.0
        %221 = vmatprep.subr.mxu0 0.0
        %222 = vmatpush1.msra.mxu0 0.0
        %223 = vmatprep.subr.mxu0 0.0
        %224 = vmatpush1.msra.mxu0 0.0
        %225 = vmatprep.subr.mxu0 0.0
        %226 = vmatpush1.msra.mxu0 0.0
        %227 = vmatprep.subr.mxu0 0.0
        %228 = vmatpush1.msra.mxu0 0.0
        %229 = vmatprep.subr.mxu0 0.0
        %230 = vmatpush1.msra.mxu0 0.0
        %231 = vmatprep.subr.mxu0 0.0
        %232 = vmatpush1.msra.mxu0 0.0
        %233 = vmatprep.subr.mxu0 0.0
        %234 = vmatpush1.msra.mxu0 0.0
        %235 = vmatprep.subr.mxu0 0.0
        %236 = vmatpush1.msra.mxu0 0.0
        %237 = vmatprep.subr.mxu0 0.0
        %238 = vmatpush1.msra.mxu0 0.0
        %239 = vmatprep.subr.mxu0 0.0
        %240 = vmatpush1.msra.mxu0 0.0
        %241 = vmatprep.mubr.f32.mxu0 0.0
        %v242 = vand.u32 %v170, 4294901760
        %v243 = vsub.f32 %v170, %v242
        %v244 = vand.u32 %v243, 4294901760
        %v245 = vsub.f32 %v243, %v244
        %v246 = vand.u32 %v245, 4294901760
        %247 = vmatmul.mubr.f32.gmra.mrb[0].mxu0 %v246
        %v248 = vpop.f32.mrb[0].mxu0
        %v249 = vadd.f32 0.0, %v248
        %v250 = vpop.f32.mrb[0].mxu0
        %251 = vdwg.mxu0
        %252 = vmatprep.subr.mxu0 0.0
        %v253 = vand.u32 %v163, 4294901760
        %v254 = vsub.f32 %v163, %v253
        %v255 = vand.u32 %v254, 4294901760
        %v256 = vsub.f32 %v254, %v255
        %v257 = vand.u32 %v256, 4294901760
        %258 = vmatpush1.msra.mxu0 %v257
        %259 = vmatprep.subr.mxu0 0.0
        %v260 = vand.u32 %v164, 4294901760
        %v261 = vsub.f32 %v164, %v260
        %v262 = vand.u32 %v261, 4294901760
        %v263 = vsub.f32 %v261, %v262
        %v264 = vand.u32 %v263, 4294901760
        %265 = vmatpush1.msra.mxu0 %v264
        %266 = vmatprep.subr.mxu0 0.0
        %v267 = vand.u32 %v165, 4294901760
        %v268 = vsub.f32 %v165, %v267
        %v269 = vand.u32 %v268, 4294901760
        %v270 = vsub.f32 %v268, %v269
        %v271 = vand.u32 %v270, 4294901760
        %272 = vmatpush1.msra.mxu0 %v271
        %273 = vmatprep.subr.mxu0 0.0
        %v274 = vand.u32 %v166, 4294901760
        %v275 = vsub.f32 %v166, %v274
        %v276 = vand.u32 %v275, 4294901760
        %v277 = vsub.f32 %v275, %v276
        %v278 = vand.u32 %v277, 4294901760
        %279 = vmatpush1.msra.mxu0 %v278
        %280 = vmatprep.subr.mxu0 0.0
        %v281 = vand.u32 %v167, 4294901760
        %v282 = vsub.f32 %v167, %v281
        %v283 = vand.u32 %v282, 4294901760
        %v284 = vsub.f32 %v282, %v283
        %v285 = vand.u32 %v284, 4294901760
        %286 = vmatpush1.msra.mxu0 %v285
        %287 = vmatprep.subr.mxu0 0.0
        %288 = vmatpush1.msra.mxu0 0.0
        %289 = vmatprep.subr.mxu0 0.0
        %290 = vmatpush1.msra.mxu0 0.0
        %291 = vmatprep.subr.mxu0 0.0
        %292 = vmatpush1.msra.mxu0 0.0
        %293 = vmatprep.subr.mxu0 0.0
        %294 = vmatpush1.msra.mxu0 0.0
        %295 = vmatprep.subr.mxu0 0.0
        %296 = vmatpush1.msra.mxu0 0.0
        %297 = vmatprep.subr.mxu0 0.0
        %298 = vmatpush1.msra.mxu0 0.0
        %299 = vmatprep.subr.mxu0 0.0
        %300 = vmatpush1.msra.mxu0 0.0
        %301 = vmatprep.subr.mxu0 0.0
        %302 = vmatpush1.msra.mxu0 0.0
        %303 = vmatprep.subr.mxu0 0.0
        %304 = vmatpush1.msra.mxu0 0.0
        %305 = vmatprep.subr.mxu0 0.0
        %306 = vmatpush1.msra.mxu0 0.0
        %307 = vmatprep.subr.mxu0 0.0
        %308 = vmatpush1.msra.mxu0 0.0
        %309 = vmatprep.subr.mxu0 0.0
        %310 = vmatpush1.msra.mxu0 0.0
        %311 = vmatprep.subr.mxu0 0.0
        %312 = vmatpush1.msra.mxu0 0.0
        %313 = vmatprep.subr.mxu0 0.0
        %314 = vmatpush1.msra.mxu0 0.0
        %315 = vmatprep.subr.mxu0 0.0
        %316 = vmatpush1.msra.mxu0 0.0
        %317 = vmatprep.subr.mxu0 0.0
        %318 = vmatpush1.msra.mxu0 0.0
        %319 = vmatprep.subr.mxu0 0.0
        %320 = vmatpush1.msra.mxu0 0.0
        %321 = vmatprep.subr.mxu0 0.0
        %322 = vmatpush1.msra.mxu0 0.0
        %323 = vmatprep.subr.mxu0 0.0
        %324 = vmatpush1.msra.mxu0 0.0
        %325 = vmatprep.subr.mxu0 0.0
        %326 = vmatpush1.msra.mxu0 0.0
        %327 = vmatprep.subr.mxu0 0.0
        %328 = vmatpush1.msra.mxu0 0.0
        %329 = vmatprep.subr.mxu0 0.0
        %330 = vmatpush1.msra.mxu0 0.0
        %331 = vmatprep.subr.mxu0 0.0
        %332 = vmatpush1.msra.mxu0 0.0
        %333 = vmatprep.subr.mxu0 0.0
        %334 = vmatpush1.msra.mxu0 0.0
        %335 = vmatprep.subr.mxu0 0.0
        %336 = vmatpush1.msra.mxu0 0.0
        %337 = vmatprep.subr.mxu0 0.0
        %338 = vmatpush1.msra.mxu0 0.0
        %339 = vmatprep.subr.mxu0 0.0
        %340 = vmatpush1.msra.mxu0 0.0
        %341 = vmatprep.mubr.f32.mxu0 0.0
        %v342 = vand.u32 %v170, 4294901760
        %343 = vmatmul.mubr.f32.gmra.mrb[0].mxu0 %v342
        %v344 = vpop.f32.mrb[0].mxu0
        %v345 = vadd.f32 %v249, %v344
        %v346 = vpop.f32.mrb[0].mxu0
        %347 = vdwg.mxu0
        %348 = vmatprep.subr.mxu0 0.0
        %v349 = vand.u32 %v163, 4294901760
        %v350 = vsub.f32 %v163, %v349
        %351 = vmatpush1.msra.mxu0 %v350
        %352 = vmatprep.subr.mxu0 0.0
        %v353 = vand.u32 %v164, 4294901760
        %v354 = vsub.f32 %v164, %v353
        %355 = vmatpush1.msra.mxu0 %v354
        %356 = vmatprep.subr.mxu0 0.0
        %v357 = vand.u32 %v165, 4294901760
        %v358 = vsub.f32 %v165, %v357
        %359 = vmatpush1.msra.mxu0 %v358
        %360 = vmatprep.subr.mxu0 0.0
        %v361 = vand.u32 %v166, 4294901760
        %v362 = vsub.f32 %v166, %v361
        %363 = vmatpush1.msra.mxu0 %v362
        %364 = vmatprep.subr.mxu0 0.0
        %v365 = vand.u32 %v167, 4294901760
        %v366 = vsub.f32 %v167, %v365
        %367 = vmatpush1.msra.mxu0 %v366
        %368 = vmatprep.subr.mxu0 0.0
        %369 = vmatpush1.msra.mxu0 0.0
        %370 = vmatprep.subr.mxu0 0.0
        %371 = vmatpush1.msra.mxu0 0.0
        %372 = vmatprep.subr.mxu0 0.0
        %373 = vmatpush1.msra.mxu0 0.0
        %374 = vmatprep.subr.mxu0 0.0
        %375 = vmatpush1.msra.mxu0 0.0
        %376 = vmatprep.subr.mxu0 0.0
        %377 = vmatpush1.msra.mxu0 0.0
        %378 = vmatprep.subr.mxu0 0.0
        %379 = vmatpush1.msra.mxu0 0.0
        %380 = vmatprep.subr.mxu0 0.0
        %381 = vmatpush1.msra.mxu0 0.0
        %382 = vmatprep.subr.mxu0 0.0
        %383 = vmatpush1.msra.mxu0 0.0
        %384 = vmatprep.subr.mxu0 0.0
        %385 = vmatpush1.msra.mxu0 0.0
        %386 = vmatprep.subr.mxu0 0.0
        %387 = vmatpush1.msra.mxu0 0.0
        %388 = vmatprep.subr.mxu0 0.0
        %389 = vmatpush1.msra.mxu0 0.0
        %390 = vmatprep.subr.mxu0 0.0
        %391 = vmatpush1.msra.mxu0 0.0
        %392 = vmatprep.subr.mxu0 0.0
        %393 = vmatpush1.msra.mxu0 0.0
        %394 = vmatprep.subr.mxu0 0.0
        %395 = vmatpush1.msra.mxu0 0.0
        %396 = vmatprep.subr.mxu0 0.0
        %397 = vmatpush1.msra.mxu0 0.0
        %398 = vmatprep.subr.mxu0 0.0
        %399 = vmatpush1.msra.mxu0 0.0
        %400 = vmatprep.subr.mxu0 0.0
        %401 = vmatpush1.msra.mxu0 0.0
        %402 = vmatprep.subr.mxu0 0.0
        %403 = vmatpush1.msra.mxu0 0.0
        %404 = vmatprep.subr.mxu0 0.0
        %405 = vmatpush1.msra.mxu0 0.0
        %406 = vmatprep.subr.mxu0 0.0
        %407 = vmatpush1.msra.mxu0 0.0
        %408 = vmatprep.subr.mxu0 0.0
        %409 = vmatpush1.msra.mxu0 0.0
        %410 = vmatprep.subr.mxu0 0.0
        %411 = vmatpush1.msra.mxu0 0.0
        %412 = vmatprep.subr.mxu0 0.0
        %413 = vmatpush1.msra.mxu0 0.0
        %414 = vmatprep.subr.mxu0 0.0
        %415 = vmatpush1.msra.mxu0 0.0
        %416 = vmatprep.subr.mxu0 0.0
        %417 = vmatpush1.msra.mxu0 0.0
        %418 = vmatprep.subr.mxu0 0.0
        %419 = vmatpush1.msra.mxu0 0.0
        %420 = vmatprep.subr.mxu0 0.0
        %421 = vmatpush1.msra.mxu0 0.0
        %422 = vmatprep.mubr.f32.mxu0 0.0
        %v423 = vand.u32 %v170, 4294901760
        %v424 = vsub.f32 %v170, %v423
        %425 = vmatmul.mubr.f32.gmra.mrb[0].mxu0 %v424
        %v426 = vpop.f32.mrb[0].mxu0
        %v427 = vadd.f32 %v345, %v426
        %v428 = vpop.f32.mrb[0].mxu0
        %429 = vdwg.mxu0
        %430 = vmatprep.subr.mxu0 0.0
        %v431 = vand.u32 %v163, 4294901760
        %432 = vmatpush1.msra.mxu0 %v431
        %433 = vmatprep.subr.mxu0 0.0
        %v434 = vand.u32 %v164, 4294901760
        %435 = vmatpush1.msra.mxu0 %v434
        %436 = vmatprep.subr.mxu0 0.0
        %v437 = vand.u32 %v165, 4294901760
        %438 = vmatpush1.msra.mxu0 %v437
        %439 = vmatprep.subr.mxu0 0.0
        %v440 = vand.u32 %v166, 4294901760
        %441 = vmatpush1.msra.mxu0 %v440
        %442 = vmatprep.subr.mxu0 0.0
        %v443 = vand.u32 %v167, 4294901760
        %444 = vmatpush1.msra.mxu0 %v443
        %445 = vmatprep.subr.mxu0 0.0
        %446 = vmatpush1.msra.mxu0 0.0
        %447 = vmatprep.subr.mxu0 0.0
        %448 = vmatpush1.msra.mxu0 0.0
        %449 = vmatprep.subr.mxu0 0.0
        %450 = vmatpush1.msra.mxu0 0.0
        %451 = vmatprep.subr.mxu0 0.0
        %452 = vmatpush1.msra.mxu0 0.0
        %453 = vmatprep.subr.mxu0 0.0
        %454 = vmatpush1.msra.mxu0 0.0
        %455 = vmatprep.subr.mxu0 0.0
        %456 = vmatpush1.msra.mxu0 0.0
        %457 = vmatprep.subr.mxu0 0.0
        %458 = vmatpush1.msra.mxu0 0.0
        %459 = vmatprep.subr.mxu0 0.0
        %460 = vmatpush1.msra.mxu0 0.0
        %461 = vmatprep.subr.mxu0 0.0
        %462 = vmatpush1.msra.mxu0 0.0
        %463 = vmatprep.subr.mxu0 0.0
        %464 = vmatpush1.msra.mxu0 0.0
        %465 = vmatprep.subr.mxu0 0.0
        %466 = vmatpush1.msra.mxu0 0.0
        %467 = vmatprep.subr.mxu0 0.0
        %468 = vmatpush1.msra.mxu0 0.0
        %469 = vmatprep.subr.mxu0 0.0
        %470 = vmatpush1.msra.mxu0 0.0
        %471 = vmatprep.subr.mxu0 0.0
        %472 = vmatpush1.msra.mxu0 0.0
        %473 = vmatprep.subr.mxu0 0.0
        %474 = vmatpush1.msra.mxu0 0.0
        %475 = vmatprep.subr.mxu0 0.0
        %476 = vmatpush1.msra.mxu0 0.0
        %477 = vmatprep.subr.mxu0 0.0
        %478 = vmatpush1.msra.mxu0 0.0
        %479 = vmatprep.subr.mxu0 0.0
        %480 = vmatpush1.msra.mxu0 0.0
        %481 = vmatprep.subr.mxu0 0.0
        %482 = vmatpush1.msra.mxu0 0.0
        %483 = vmatprep.subr.mxu0 0.0
        %484 = vmatpush1.msra.mxu0 0.0
        %485 = vmatprep.subr.mxu0 0.0
        %486 = vmatpush1.msra.mxu0 0.0
        %487 = vmatprep.subr.mxu0 0.0
        %488 = vmatpush1.msra.mxu0 0.0
        %489 = vmatprep.subr.mxu0 0.0
        %490 = vmatpush1.msra.mxu0 0.0
        %491 = vmatprep.subr.mxu0 0.0
        %492 = vmatpush1.msra.mxu0 0.0
        %493 = vmatprep.subr.mxu0 0.0
        %494 = vmatpush1.msra.mxu0 0.0
        %495 = vmatprep.subr.mxu0 0.0
        %496 = vmatpush1.msra.mxu0 0.0
        %497 = vmatprep.subr.mxu0 0.0
        %498 = vmatpush1.msra.mxu0 0.0
        %499 = vmatprep.mubr.f32.mxu0 0.0
        %v500 = vand.u32 %v170, 4294901760
        %v501 = vsub.f32 %v170, %v500
        %v502 = vand.u32 %v501, 4294901760
        %503 = vmatmul.mubr.f32.gmra.mrb[0].mxu0 %v502
        %v504 = vpop.f32.mrb[0].mxu0
        %v505 = vadd.f32 %v427, %v504
        %v506 = vpop.f32.mrb[0].mxu0
        %507 = vdwg.mxu0
        %508 = vmatprep.subr.mxu0 0.0
        %v509 = vand.u32 %v163, 4294901760
        %v510 = vsub.f32 %v163, %v509
        %v511 = vand.u32 %v510, 4294901760
        %512 = vmatpush1.msra.mxu0 %v511
        %513 = vmatprep.subr.mxu0 0.0
        %v514 = vand.u32 %v164, 4294901760
        %v515 = vsub.f32 %v164, %v514
        %v516 = vand.u32 %v515, 4294901760
        %517 = vmatpush1.msra.mxu0 %v516
        %518 = vmatprep.subr.mxu0 0.0
        %v519 = vand.u32 %v165, 4294901760
        %v520 = vsub.f32 %v165, %v519
        %v521 = vand.u32 %v520, 4294901760
        %522 = vmatpush1.msra.mxu0 %v521
        %523 = vmatprep.subr.mxu0 0.0
        %v524 = vand.u32 %v166, 4294901760
        %v525 = vsub.f32 %v166, %v524
        %v526 = vand.u32 %v525, 4294901760
        %527 = vmatpush1.msra.mxu0 %v526
        %528 = vmatprep.subr.mxu0 0.0
        %v529 = vand.u32 %v167, 4294901760
        %v530 = vsub.f32 %v167, %v529
        %v531 = vand.u32 %v530, 4294901760
        %532 = vmatpush1.msra.mxu0 %v531
        %533 = vmatprep.subr.mxu0 0.0
        %534 = vmatpush1.msra.mxu0 0.0
        %535 = vmatprep.subr.mxu0 0.0
        %536 = vmatpush1.msra.mxu0 0.0
        %537 = vmatprep.subr.mxu0 0.0
        %538 = vmatpush1.msra.mxu0 0.0
        %539 = vmatprep.subr.mxu0 0.0
        %540 = vmatpush1.msra.mxu0 0.0
        %541 = vmatprep.subr.mxu0 0.0
        %542 = vmatpush1.msra.mxu0 0.0
        %543 = vmatprep.subr.mxu0 0.0
        %544 = vmatpush1.msra.mxu0 0.0
        %545 = vmatprep.subr.mxu0 0.0
        %546 = vmatpush1.msra.mxu0 0.0
        %547 = vmatprep.subr.mxu0 0.0
        %548 = vmatpush1.msra.mxu0 0.0
        %549 = vmatprep.subr.mxu0 0.0
        %550 = vmatpush1.msra.mxu0 0.0
        %551 = vmatprep.subr.mxu0 0.0
        %552 = vmatpush1.msra.mxu0 0.0
        %553 = vmatprep.subr.mxu0 0.0
        %554 = vmatpush1.msra.mxu0 0.0
        %555 = vmatprep.subr.mxu0 0.0
        %556 = vmatpush1.msra.mxu0 0.0
        %557 = vmatprep.subr.mxu0 0.0
        %558 = vmatpush1.msra.mxu0 0.0
        %559 = vmatprep.subr.mxu0 0.0
        %560 = vmatpush1.msra.mxu0 0.0
        %561 = vmatprep.subr.mxu0 0.0
        %562 = vmatpush1.msra.mxu0 0.0
        %563 = vmatprep.subr.mxu0 0.0
        %564 = vmatpush1.msra.mxu0 0.0
        %565 = vmatprep.subr.mxu0 0.0
        %566 = vmatpush1.msra.mxu0 0.0
        %567 = vmatprep.subr.mxu0 0.0
        %568 = vmatpush1.msra.mxu0 0.0
        %569 = vmatprep.subr.mxu0 0.0
        %570 = vmatpush1.msra.mxu0 0.0
        %571 = vmatprep.subr.mxu0 0.0
        %572 = vmatpush1.msra.mxu0 0.0
        %573 = vmatprep.subr.mxu0 0.0
        %574 = vmatpush1.msra.mxu0 0.0
        %575 = vmatprep.subr.mxu0 0.0
        %576 = vmatpush1.msra.mxu0 0.0
        %577 = vmatprep.subr.mxu0 0.0
        %578 = vmatpush1.msra.mxu0 0.0
        %579 = vmatprep.subr.mxu0 0.0
        %580 = vmatpush1.msra.mxu0 0.0
        %581 = vmatprep.subr.mxu0 0.0
        %582 = vmatpush1.msra.mxu0 0.0
        %583 = vmatprep.subr.mxu0 0.0
        %584 = vmatpush1.msra.mxu0 0.0
        %585 = vmatprep.subr.mxu0 0.0
        %586 = vmatpush1.msra.mxu0 0.0
        %587 = vmatprep.mubr.f32.mxu0 0.0
        %v588 = vand.u32 %v170, 4294901760
        %589 = vmatmul.mubr.f32.gmra.mrb[0].mxu0 %v588
        %v590 = vpop.f32.mrb[0].mxu0
        %v591 = vadd.f32 %v505, %v590
        %v592 = vpop.f32.mrb[0].mxu0
        %593 = vdwg.mxu0
        %594 = vmatprep.subr.mxu0 0.0
        %v595 = vand.u32 %v163, 4294901760
        %596 = vmatpush1.msra.mxu0 %v595
        %597 = vmatprep.subr.mxu0 0.0
        %v598 = vand.u32 %v164, 4294901760
        %599 = vmatpush1.msra.mxu0 %v598
        %600 = vmatprep.subr.mxu0 0.0
        %v601 = vand.u32 %v165, 4294901760
        %602 = vmatpush1.msra.mxu0 %v601
        %603 = vmatprep.subr.mxu0 0.0
        %v604 = vand.u32 %v166, 4294901760
        %605 = vmatpush1.msra.mxu0 %v604
        %606 = vmatprep.subr.mxu0 0.0
        %v607 = vand.u32 %v167, 4294901760
        %608 = vmatpush1.msra.mxu0 %v607
        %609 = vmatprep.subr.mxu0 0.0
        %610 = vmatpush1.msra.mxu0 0.0
        %611 = vmatprep.subr.mxu0 0.0
        %612 = vmatpush1.msra.mxu0 0.0
        %613 = vmatprep.subr.mxu0 0.0
        %614 = vmatpush1.msra.mxu0 0.0
        %615 = vmatprep.subr.mxu0 0.0
        %616 = vmatpush1.msra.mxu0 0.0
        %617 = vmatprep.subr.mxu0 0.0
        %618 = vmatpush1.msra.mxu0 0.0
        %619 = vmatprep.subr.mxu0 0.0
        %620 = vmatpush1.msra.mxu0 0.0
        %621 = vmatprep.subr.mxu0 0.0
        %622 = vmatpush1.msra.mxu0 0.0
        %623 = vmatprep.subr.mxu0 0.0
        %624 = vmatpush1.msra.mxu0 0.0
        %625 = vmatprep.subr.mxu0 0.0
        %626 = vmatpush1.msra.mxu0 0.0
        %627 = vmatprep.subr.mxu0 0.0
        %628 = vmatpush1.msra.mxu0 0.0
        %629 = vmatprep.subr.mxu0 0.0
        %630 = vmatpush1.msra.mxu0 0.0
        %631 = vmatprep.subr.mxu0 0.0
        %632 = vmatpush1.msra.mxu0 0.0
        %633 = vmatprep.subr.mxu0 0.0
        %634 = vmatpush1.msra.mxu0 0.0
        %635 = vmatprep.subr.mxu0 0.0
        %636 = vmatpush1.msra.mxu0 0.0
        %637 = vmatprep.subr.mxu0 0.0
        %638 = vmatpush1.msra.mxu0 0.0
        %639 = vmatprep.subr.mxu0 0.0
        %640 = vmatpush1.msra.mxu0 0.0
        %641 = vmatprep.subr.mxu0 0.0
        %642 = vmatpush1.msra.mxu0 0.0
        %643 = vmatprep.subr.mxu0 0.0
        %644 = vmatpush1.msra.mxu0 0.0
        %645 = vmatprep.subr.mxu0 0.0
        %646 = vmatpush1.msra.mxu0 0.0
        %647 = vmatprep.subr.mxu0 0.0
        %648 = vmatpush1.msra.mxu0 0.0
        %649 = vmatprep.subr.mxu0 0.0
        %650 = vmatpush1.msra.mxu0 0.0
        %651 = vmatprep.subr.mxu0 0.0
        %652 = vmatpush1.msra.mxu0 0.0
        %653 = vmatprep.subr.mxu0 0.0
        %654 = vmatpush1.msra.mxu0 0.0
        %655 = vmatprep.subr.mxu0 0.0
        %656 = vmatpush1.msra.mxu0 0.0
        %657 = vmatprep.subr.mxu0 0.0
        %658 = vmatpush1.msra.mxu0 0.0
        %659 = vmatprep.subr.mxu0 0.0
        %660 = vmatpush1.msra.mxu0 0.0
        %661 = vmatprep.subr.mxu0 0.0
        %662 = vmatpush1.msra.mxu0 0.0
        %663 = vmatprep.mubr.f32.mxu0 0.0
        %v664 = vand.u32 %v170, 4294901760
        %665 = vmatmul.mubr.f32.gmra.mrb[0].mxu0 %v664
        %v666 = vpop.f32.mrb[0].mxu0
        %v667 = vadd.f32 %v591, %v666
        %v668 = vpop.f32.mrb[0].mxu0
        %669 = vdwg.mxu0
        %670 = vst [vmem:[%s149] sm:$0xff] %v667
        %s671 = sand.u32 %s72, 1
        %s672 = scalar_lea.sflag [#allocation4], %s671
        %s673 = sand.u32 %s72, 1
        %s674 = smul.addr %s673, 8
        %s675 = scalar_lea.vmem [#allocation5], %s674
        // Predicated region
        $region33: #{tpu_custom_call.1} parent=27 // pred_check
          %p676 = pneg %p82
        $region34: #{tpu_custom_call.1} parent=27 // pred_check_branch
          %678 = sbr.rel (%p676) target = $region36
        $region35: #{tpu_custom_call.1} parent=27 // pred_region
          %s680 = ssub.s32 128, 128
          %681 = vsyncadd %s672, %s680
          %s682 = smul.addr %s17, 128
          %s683 = scalar_lea.hbm %s2, %s682
          %s685 = sshll.u32 %s675, 4
          %s686 = int_to_ptr.vmem [resolvable:$true] %s685
          %688 = dma.vmem_to_hbm [thread:$0]  %s686, 128, %s683, %s672
        $region36: #{tpu_custom_call.1} parent=27 // pred_fallthru
          _
      $region28: #{tpu_custom_call.1} parent=5 // pred_fallthru
        _
      %p689 = scmp.le.s32.totalorder 2, %s12
      // Predicated region
      $region37: #{tpu_custom_call.1} parent=5 // pred_check
        %p690 = pneg %p689
      $region38: #{tpu_custom_call.1} parent=5 // pred_check_branch
        %692 = sbr.rel (%p690) target = $region40
      $region39: #{tpu_custom_call.1} parent=5 // pred_region
        %s693 = ssub.s32 %s12, 2
        // Predicated region
        $region41: #{tpu_custom_call.1} parent=39 // pred_check
          %p694 = pneg %p88
        $region42: #{tpu_custom_call.1} parent=39 // pred_check_branch
          %696 = sbr.rel (%p694) target = $region44
        $region43: #{tpu_custom_call.1} parent=39 // pred_region
          %s697 = sand.u32 %s73, 1
          %s698 = scalar_lea.sflag [#allocation4], %s697
          %s699 = sand.u32 %s73, 1
          %s700 = smul.addr %s699, 8
          %s701 = scalar_lea.vmem [#allocation5], %s700
          %702 = dma.done %s698, 128
        $region44: #{tpu_custom_call.1} parent=39 // pred_fallthru
          _
      $region40: #{tpu_custom_call.1} parent=5 // pred_fallthru
        _
    $region6: #{tpu_custom_call.1} parent=1 // loop_footer
      %s16 = sadd.s32 1, %s12
    $region7: #{tpu_custom_call.1} parent=1 // loop_footer_branch
      %11 = sbr.rel target = $region3
    $region8: #{tpu_custom_call.1} parent=1 // loop_exit
      _
    %703 = vsyncpa [#allocation3], 1
    %s704 = scalar_lea.sflag [#allocation3], 1
    %705 = vsyncpa %s704, 1
    %706 = vsyncpa [#allocation4], 1
    %s707 = scalar_lea.sflag [#allocation4], 1
    %708 = vsyncpa %s707, 1

</llo_original>
